<compile_context>
chip_gen: v7x
topology: tpu7x:2x2x1
jax: 0.10.0
libtpu: 0.0.40
codegen_flags: <defaults>
</compile_context>

<pallas_src>
import jax
import jax.numpy as jnp
from jax.experimental import pallas as pl
from jax.experimental.pallas import tpu as pltpu  # noqa: F401  (TPU-specific tuning hooks)

INPUT_SIZE = 43
HIDDEN = 32
D_PAD = 64          # input feature dim padded 43 -> 64 (multiple of 8 sublanes)
B_PAD = 8           # batch padded to one f32 sublane tile


def _rnn_kernel(x_ref, h0_ref, c0_ref, wih_ref, whh_ref, b_ref,
                wout_ref, bout_ref,
                y_ref, hn_ref, cn_ref):
    # x_ref   : (T*Bp, Dp)  time-major, batch-padded, feature-padded input
    # h0/c0   : (Bp, H)     initial state (zero-padded rows beyond true batch)
    # wih_ref : (Dp, 4H)    transposed + zero-padded weight_ih_l0 (g cols *2)
    # whh_ref : (H, 4H)     transposed weight_hh_l0               (g cols *2)
    # b_ref   : (1, 4H)     bias_ih_l0 + bias_hh_l0               (g slot *2)
    # wout_ref: (1, H)      Linear weight as a row
    # bout_ref: (1, 1)      Linear bias
    # y_ref   : (1, T*Bp)   per-step Linear output, flattened row (time-major)
    # hn/cn   : (Bp, H)     final hidden / cell state (padded rows included)
    Bp, H = h0_ref.shape
    T = x_ref.shape[0] // Bp

    # Hoisted input projection for ALL timesteps: one MXU matmul, off the
    # sequential critical path. Zero-padded feature lanes contribute 0.
    x_proj = (jnp.dot(x_ref[...], wih_ref[...],
                      preferred_element_type=jnp.float32)
              + b_ref[...])                                    # (T*Bp, 4H)

    whh = whh_ref[...]                                         # (H, 4H)
    h = h0_ref[...]                                            # (Bp, H)
    c = c0_ref[...]                                            # (Bp, H)

    hs = []
    # T is small (8): fully unrolled recurrence; all indices are static and
    # every per-step slice is an aligned (8, 128)/(8, 32) tile.
    for t in range(T):
        gates = x_proj[t * Bp:(t + 1) * Bp, :] + jnp.dot(
            h, whh, preferred_element_type=jnp.float32)        # (Bp, 4H)

        # Single EUP launch per step: all four gates through sigmoid.
        # g-gate preactivation was pre-scaled by 2, so tanh(z) = 2*sigmoid(2z)-1.
        sig = jax.nn.sigmoid(gates)
        i_g = sig[:, 0 * H:1 * H]
        f_g = sig[:, 1 * H:2 * H]
        g_g = 2.0 * sig[:, 2 * H:3 * H] - 1.0                  # tanh via sigmoid identity
        o_g = sig[:, 3 * H:4 * H]

        c = f_g * c + i_g * g_g
        h = o_g * jnp.tanh(c)                                  # (Bp, H) EUP launch
        hs.append(h)

    hn_ref[...] = h
    cn_ref[...] = c

    # Epilogue: single Linear(32 -> 1) over all timesteps, emitted as one
    # lane-contiguous row store (no per-step XLU reductions / masked stores).
    h_all = jnp.concatenate(hs, axis=0)                        # (T*Bp, H)
    y_row = jax.lax.dot_general(
        wout_ref[...], h_all,
        (((1,), (1,)), ((), ())),
        preferred_element_type=jnp.float32) + bout_ref[...]    # (1, T*Bp)
    y_ref[...] = y_row


def prepare_params(params, d_pad=D_PAD):
    """One-time parameter preprocessing (hoisted out of the per-call path)."""
    w_ih, w_hh, b_ih, b_hh, w_out, b_out = params
    H = w_hh.shape[1]
    D = w_ih.shape[1]
    Dp = max(d_pad, ((D + 7) // 8) * 8)      # round up to sublane multiple

    # Pre-scale the g-gate (tanh) columns by 2 so the kernel needs only one
    # sigmoid launch per step: tanh(z) = 2*sigmoid(2z) - 1.
    scale = jnp.concatenate([jnp.ones((2 * H,), jnp.float32),
                             jnp.full((H,), 2.0, jnp.float32),
                             jnp.ones((H,), jnp.float32)])

    wih_p = jnp.pad(jnp.transpose(w_ih), ((0, Dp - D), (0, 0))) * scale[None, :]  # (Dp, 4H)
    whh_t = jnp.transpose(w_hh) * scale[None, :]                                   # (H, 4H)
    bias = ((b_ih + b_hh) * scale).reshape(1, 4 * H)                               # (1, 4H)
    wout_row = w_out.reshape(1, H)                                                 # (1, H)
    bout = b_out.reshape(1, 1)                                                     # (1, 1)
    return (wih_p, whh_t, bias, wout_row, bout)


def rnn_forward(x, h_state, prepped):
    """x: (B, T, INPUT_SIZE) f32, h_state = (h0, c0) each (1, B, H).
    Returns (outs (B, T, 1), (h_n, c_n) each (1, B, H)) — matches Rnn.forward."""
    wih_p, whh_t, bias, wout_row, bout = prepped
    B, T, D = x.shape
    H = whh_t.shape[0]
    Dp = wih_p.shape[0]
    Bp = max(B_PAD, ((B + 7) // 8) * 8)

    h0, c0 = h_state
    h0p = jnp.pad(h0[0], ((0, Bp - B), (0, 0)))                  # (Bp, H)
    c0p = jnp.pad(c0[0], ((0, Bp - B), (0, 0)))

    # Batch-pad, feature-pad, time-major flatten: (T*Bp, Dp).
    x_p = jnp.pad(x, ((0, Bp - B), (0, 0), (0, Dp - D)))
    x_tm = jnp.transpose(x_p, (1, 0, 2)).reshape(T * Bp, Dp)

    cost = pl.CostEstimate(
        flops=(2 * T * Bp * Dp * 4 * H          # hoisted input projection
               + 2 * T * Bp * H * 4 * H         # recurrent matmuls
               + 2 * T * Bp * H                 # epilogue Linear
               + 12 * T * Bp * H),              # gates/cell elementwise
        transcendentals=5 * T * Bp * H,         # sigmoid(4H) + tanh(c)(H) per step
        bytes_accessed=4 * (T * Bp * Dp + Dp * 4 * H + H * 4 * H + 4 * H
                            + H + 1 + 4 * Bp * H + T * Bp),
    )

    # Single kernel invocation (no grid): every array lives whole in VMEM,
    # total footprint < 100 KB — fine on v5e/v6e (128 MiB) and v7x (64 MiB).
    y_row, h_n, c_n = pl.pallas_call(
        _rnn_kernel,
        out_shape=(
            jax.ShapeDtypeStruct((1, T * Bp), jnp.float32),
            jax.ShapeDtypeStruct((Bp, H), jnp.float32),
            jax.ShapeDtypeStruct((Bp, H), jnp.float32),
        ),
        cost_estimate=cost,
    )(x_tm, h0p, c0p, wih_p, whh_t, bias, wout_row, bout)

    outs = jnp.transpose(y_row.reshape(T, Bp)[:, :B], (1, 0))[..., None]  # (B, T, 1)
    return outs, (h_n[:B][None, :, :], c_n[:B][None, :, :])


def _reference(x, h_state, params):
    """Pure-JAX reference matching PyTorch LSTM + Linear semantics."""
    w_ih, w_hh, b_ih, b_hh, w_out, b_out = params
    h, c = h_state[0][0], h_state[1][0]
    H = h.shape[1]

    def step(carry, x_t):
        h, c = carry
        gates = x_t @ w_ih.T + b_ih + h @ w_hh.T + b_hh
        i = jax.nn.sigmoid(gates[:, 0 * H:1 * H])
        f = jax.nn.sigmoid(gates[:, 1 * H:2 * H])
        g = jnp.tanh(gates[:, 2 * H:3 * H])
        o = jax.nn.sigmoid(gates[:, 3 * H:4 * H])
        c = f * c + i * g
        h = o * jnp.tanh(c)
        y = h @ w_out.T + b_out
        return (h, c), y

    (h, c), ys = jax.lax.scan(step, (h, c), jnp.transpose(x, (1, 0, 2)))
    return jnp.transpose(ys, (1, 0, 2)), (h[None], c[None])


def init_params(key, input_size=INPUT_SIZE, hidden=HIDDEN):
    # PyTorch default init: U(-1/sqrt(H), 1/sqrt(H)) for all LSTM/Linear params.
    k = 1.0 / jnp.sqrt(jnp.float32(hidden))
    keys = jax.random.split(key, 6)
    w_ih = jax.random.uniform(keys[0], (4 * hidden, input_size), jnp.float32, -k, k)
    w_hh = jax.random.uniform(keys[1], (4 * hidden, hidden), jnp.float32, -k, k)
    b_ih = jax.random.uniform(keys[2], (4 * hidden,), jnp.float32, -k, k)
    b_hh = jax.random.uniform(keys[3], (4 * hidden,), jnp.float32, -k, k)
    w_out = jax.random.uniform(keys[4], (1, hidden), jnp.float32, -k, k)
    b_out = jax.random.uniform(keys[5], (1,), jnp.float32, -k, k)
    return (w_ih, w_hh, b_ih, b_hh, w_out, b_out)


if __name__ == "__main__":
    key = jax.random.PRNGKey(0)
    kx, kh, kc, kp = jax.random.split(key, 4)

    B, T, D, H = 2, 8, INPUT_SIZE, HIDDEN
    x = jax.random.normal(kx, (B, T, D), jnp.float32)
    h0 = jax.random.normal(kh, (1, B, H), jnp.float32)
    c0 = jax.random.normal(kc, (1, B, H), jnp.float32)
    params = init_params(kp)

    # One-time parameter prep (hoisted out of the per-call path).
    prepped = jax.block_until_ready(prepare_params(params))

    fwd = jax.jit(rnn_forward)
    outs, (h_n, c_n) = fwd(x, (h0, c0), prepped)
    jax.block_until_ready((outs, h_n, c_n))

    ref_outs, (ref_h, ref_c) = _reference(x, (h0, c0), params)
    assert outs.shape == (B, T, 1) and h_n.shape == (1, B, H) and c_n.shape == (1, B, H)
    # The 2*sigmoid(2z)-1 tanh identity introduces only ~1e-6-level f32 drift.
    assert jnp.allclose(outs, ref_outs, atol=3e-5, rtol=3e-5)
    assert jnp.allclose(h_n, ref_h, atol=3e-5, rtol=3e-5)
    assert jnp.allclose(c_n, ref_c, atol=3e-5, rtol=3e-5)

    print("KERNEL_OK")
</pallas_src>

<mosaic_0001>
module attributes {stable_mosaic.version = 11 : i64} {
  func.func @_rnn_kernel(%arg0: memref<64x64xf32, #tpu.memory_space<vmem>>, %arg1: memref<8x32xf32, #tpu.memory_space<vmem>>, %arg2: memref<8x32xf32, #tpu.memory_space<vmem>>, %arg3: memref<64x128xf32, #tpu.memory_space<vmem>>, %arg4: memref<32x128xf32, #tpu.memory_space<vmem>>, %arg5: memref<1x128xf32, #tpu.memory_space<vmem>>, %arg6: memref<1x32xf32, #tpu.memory_space<vmem>>, %arg7: memref<1x1xf32, #tpu.memory_space<vmem>>, %arg8: memref<1x64xf32, #tpu.memory_space<vmem>>, %arg9: memref<8x32xf32, #tpu.memory_space<vmem>>, %arg10: memref<8x32xf32, #tpu.memory_space<vmem>>) attributes {dimension_semantics = [], scalar_prefetch = 0 : i64, scratch_operands = 0 : i64, tpu.core_type = #tpu.core_type<tc>} {
    %c0 = arith.constant 0 : index
    %c0_0 = arith.constant 0 : index
    %0 = vector.load %arg0[%c0, %c0_0] : memref<64x64xf32, #tpu.memory_space<vmem>>, vector<64x64xf32>
    %c0_1 = arith.constant 0 : index
    %c0_2 = arith.constant 0 : index
    %1 = vector.load %arg3[%c0_1, %c0_2] : memref<64x128xf32, #tpu.memory_space<vmem>>, vector<64x128xf32>
    %cst = arith.constant dense<0.000000e+00> : vector<64x128xf32>
    %2 = tpu.matmul %0, %1, %cst {dimension_numbers = #tpu.dot_dimension_numbers<[1], [0], [0], [1], [0, 0, 1, 1], [], []>} : vector<64x64xf32>, vector<64x128xf32>, vector<64x128xf32> -> vector<64x128xf32>
    %c0_3 = arith.constant 0 : index
    %c0_4 = arith.constant 0 : index
    %3 = vector.load %arg5[%c0_3, %c0_4] : memref<1x128xf32, #tpu.memory_space<vmem>>, vector<1x128xf32>
    %4 = vector.broadcast %3 : vector<1x128xf32> to vector<64x128xf32>
    %5 = arith.addf %2, %4 : vector<64x128xf32>
    %c0_5 = arith.constant 0 : index
    %c0_6 = arith.constant 0 : index
    %6 = vector.load %arg4[%c0_5, %c0_6] : memref<32x128xf32, #tpu.memory_space<vmem>>, vector<32x128xf32>
    %c0_7 = arith.constant 0 : index
    %c0_8 = arith.constant 0 : index
    %7 = vector.load %arg1[%c0_7, %c0_8] : memref<8x32xf32, #tpu.memory_space<vmem>>, vector<8x32xf32>
    %c0_9 = arith.constant 0 : index
    %c0_10 = arith.constant 0 : index
    %8 = vector.load %arg2[%c0_9, %c0_10] : memref<8x32xf32, #tpu.memory_space<vmem>>, vector<8x32xf32>
    %9 = vector.extract_strided_slice %5 {offsets = [0, 0], sizes = [8, 128], strides = [1, 1]} : vector<64x128xf32> to vector<8x128xf32>
    %cst_11 = arith.constant dense<0.000000e+00> : vector<8x128xf32>
    %10 = tpu.matmul %7, %6, %cst_11 {dimension_numbers = #tpu.dot_dimension_numbers<[1], [0], [0], [1], [0, 0, 1, 1], [], []>} : vector<8x32xf32>, vector<32x128xf32>, vector<8x128xf32> -> vector<8x128xf32>
    %11 = arith.addf %9, %10 : vector<8x128xf32>
    %12 = arith.negf %11 : vector<8x128xf32>
    %13 = math.exp %12 : vector<8x128xf32>
    %cst_12 = arith.constant 1.000000e+00 : f32
    %14 = vector.broadcast %cst_12 : f32 to vector<8x128xf32>
    %15 = arith.addf %14, %13 : vector<8x128xf32>
    %16 = arith.divf %14, %15 : vector<8x128xf32>
    %17 = vector.extract_strided_slice %16 {offsets = [0, 0], sizes = [8, 32], strides = [1, 1]} : vector<8x128xf32> to vector<8x32xf32>
    %18 = vector.extract_strided_slice %16 {offsets = [0, 32], sizes = [8, 32], strides = [1, 1]} : vector<8x128xf32> to vector<8x32xf32>
    %19 = vector.extract_strided_slice %16 {offsets = [0, 64], sizes = [8, 32], strides = [1, 1]} : vector<8x128xf32> to vector<8x32xf32>
    %cst_13 = arith.constant 2.000000e+00 : f32
    %20 = vector.broadcast %cst_13 : f32 to vector<8x32xf32>
    %21 = arith.mulf %20, %19 : vector<8x32xf32>
    %cst_14 = arith.constant 1.000000e+00 : f32
    %22 = vector.broadcast %cst_14 : f32 to vector<8x32xf32>
    %23 = arith.subf %21, %22 : vector<8x32xf32>
    %24 = vector.extract_strided_slice %16 {offsets = [0, 96], sizes = [8, 32], strides = [1, 1]} : vector<8x128xf32> to vector<8x32xf32>
    %25 = arith.mulf %18, %8 : vector<8x32xf32>
    %26 = arith.mulf %17, %23 : vector<8x32xf32>
    %27 = arith.addf %25, %26 : vector<8x32xf32>
    %28 = math.tanh %27 : vector<8x32xf32>
    %29 = arith.mulf %24, %28 : vector<8x32xf32>
    %30 = vector.extract_strided_slice %5 {offsets = [8, 0], sizes = [8, 128], strides = [1, 1]} : vector<64x128xf32> to vector<8x128xf32>
    %cst_15 = arith.constant dense<0.000000e+00> : vector<8x128xf32>
    %31 = tpu.matmul %29, %6, %cst_15 {dimension_numbers = #tpu.dot_dimension_numbers<[1], [0], [0], [1], [0, 0, 1, 1], [], []>} : vector<8x32xf32>, vector<32x128xf32>, vector<8x128xf32> -> vector<8x128xf32>
    %32 = arith.addf %30, %31 : vector<8x128xf32>
    %33 = arith.negf %32 : vector<8x128xf32>
    %34 = math.exp %33 : vector<8x128xf32>
    %cst_16 = arith.constant 1.000000e+00 : f32
    %35 = vector.broadcast %cst_16 : f32 to vector<8x128xf32>
    %36 = arith.addf %35, %34 : vector<8x128xf32>
    %37 = arith.divf %35, %36 : vector<8x128xf32>
    %38 = vector.extract_strided_slice %37 {offsets = [0, 0], sizes = [8, 32], strides = [1, 1]} : vector<8x128xf32> to vector<8x32xf32>
    %39 = vector.extract_strided_slice %37 {offsets = [0, 32], sizes = [8, 32], strides = [1, 1]} : vector<8x128xf32> to vector<8x32xf32>
    %40 = vector.extract_strided_slice %37 {offsets = [0, 64], sizes = [8, 32], strides = [1, 1]} : vector<8x128xf32> to vector<8x32xf32>
    %cst_17 = arith.constant 2.000000e+00 : f32
    %41 = vector.broadcast %cst_17 : f32 to vector<8x32xf32>
    %42 = arith.mulf %41, %40 : vector<8x32xf32>
    %cst_18 = arith.constant 1.000000e+00 : f32
    %43 = vector.broadcast %cst_18 : f32 to vector<8x32xf32>
    %44 = arith.subf %42, %43 : vector<8x32xf32>
    %45 = vector.extract_strided_slice %37 {offsets = [0, 96], sizes = [8, 32], strides = [1, 1]} : vector<8x128xf32> to vector<8x32xf32>
    %46 = arith.mulf %39, %27 : vector<8x32xf32>
    %47 = arith.mulf %38, %44 : vector<8x32xf32>
    %48 = arith.addf %46, %47 : vector<8x32xf32>
    %49 = math.tanh %48 : vector<8x32xf32>
    %50 = arith.mulf %45, %49 : vector<8x32xf32>
    %51 = vector.extract_strided_slice %5 {offsets = [16, 0], sizes = [8, 128], strides = [1, 1]} : vector<64x128xf32> to vector<8x128xf32>
    %cst_19 = arith.constant dense<0.000000e+00> : vector<8x128xf32>
    %52 = tpu.matmul %50, %6, %cst_19 {dimension_numbers = #tpu.dot_dimension_numbers<[1], [0], [0], [1], [0, 0, 1, 1], [], []>} : vector<8x32xf32>, vector<32x128xf32>, vector<8x128xf32> -> vector<8x128xf32>
    %53 = arith.addf %51, %52 : vector<8x128xf32>
    %54 = arith.negf %53 : vector<8x128xf32>
    %55 = math.exp %54 : vector<8x128xf32>
    %cst_20 = arith.constant 1.000000e+00 : f32
    %56 = vector.broadcast %cst_20 : f32 to vector<8x128xf32>
    %57 = arith.addf %56, %55 : vector<8x128xf32>
    %58 = arith.divf %56, %57 : vector<8x128xf32>
    %59 = vector.extract_strided_slice %58 {offsets = [0, 0], sizes = [8, 32], strides = [1, 1]} : vector<8x128xf32> to vector<8x32xf32>
    %60 = vector.extract_strided_slice %58 {offsets = [0, 32], sizes = [8, 32], strides = [1, 1]} : vector<8x128xf32> to vector<8x32xf32>
    %61 = vector.extract_strided_slice %58 {offsets = [0, 64], sizes = [8, 32], strides = [1, 1]} : vector<8x128xf32> to vector<8x32xf32>
    %cst_21 = arith.constant 2.000000e+00 : f32
    %62 = vector.broadcast %cst_21 : f32 to vector<8x32xf32>
    %63 = arith.mulf %62, %61 : vector<8x32xf32>
    %cst_22 = arith.constant 1.000000e+00 : f32
    %64 = vector.broadcast %cst_22 : f32 to vector<8x32xf32>
    %65 = arith.subf %63, %64 : vector<8x32xf32>
    %66 = vector.extract_strided_slice %58 {offsets = [0, 96], sizes = [8, 32], strides = [1, 1]} : vector<8x128xf32> to vector<8x32xf32>
    %67 = arith.mulf %60, %48 : vector<8x32xf32>
    %68 = arith.mulf %59, %65 : vector<8x32xf32>
    %69 = arith.addf %67, %68 : vector<8x32xf32>
    %70 = math.tanh %69 : vector<8x32xf32>
    %71 = arith.mulf %66, %70 : vector<8x32xf32>
    %72 = vector.extract_strided_slice %5 {offsets = [24, 0], sizes = [8, 128], strides = [1, 1]} : vector<64x128xf32> to vector<8x128xf32>
    %cst_23 = arith.constant dense<0.000000e+00> : vector<8x128xf32>
    %73 = tpu.matmul %71, %6, %cst_23 {dimension_numbers = #tpu.dot_dimension_numbers<[1], [0], [0], [1], [0, 0, 1, 1], [], []>} : vector<8x32xf32>, vector<32x128xf32>, vector<8x128xf32> -> vector<8x128xf32>
    %74 = arith.addf %72, %73 : vector<8x128xf32>
    %75 = arith.negf %74 : vector<8x128xf32>
    %76 = math.exp %75 : vector<8x128xf32>
    %cst_24 = arith.constant 1.000000e+00 : f32
    %77 = vector.broadcast %cst_24 : f32 to vector<8x128xf32>
    %78 = arith.addf %77, %76 : vector<8x128xf32>
    %79 = arith.divf %77, %78 : vector<8x128xf32>
    %80 = vector.extract_strided_slice %79 {offsets = [0, 0], sizes = [8, 32], strides = [1, 1]} : vector<8x128xf32> to vector<8x32xf32>
    %81 = vector.extract_strided_slice %79 {offsets = [0, 32], sizes = [8, 32], strides = [1, 1]} : vector<8x128xf32> to vector<8x32xf32>
    %82 = vector.extract_strided_slice %79 {offsets = [0, 64], sizes = [8, 32], strides = [1, 1]} : vector<8x128xf32> to vector<8x32xf32>
    %cst_25 = arith.constant 2.000000e+00 : f32
    %83 = vector.broadcast %cst_25 : f32 to vector<8x32xf32>
    %84 = arith.mulf %83, %82 : vector<8x32xf32>
    %cst_26 = arith.constant 1.000000e+00 : f32
    %85 = vector.broadcast %cst_26 : f32 to vector<8x32xf32>
    %86 = arith.subf %84, %85 : vector<8x32xf32>
    %87 = vector.extract_strided_slice %79 {offsets = [0, 96], sizes = [8, 32], strides = [1, 1]} : vector<8x128xf32> to vector<8x32xf32>
    %88 = arith.mulf %81, %69 : vector<8x32xf32>
    %89 = arith.mulf %80, %86 : vector<8x32xf32>
    %90 = arith.addf %88, %89 : vector<8x32xf32>
    %91 = math.tanh %90 : vector<8x32xf32>
    %92 = arith.mulf %87, %91 : vector<8x32xf32>
    %93 = vector.extract_strided_slice %5 {offsets = [32, 0], sizes = [8, 128], strides = [1, 1]} : vector<64x128xf32> to vector<8x128xf32>
    %cst_27 = arith.constant dense<0.000000e+00> : vector<8x128xf32>
    %94 = tpu.matmul %92, %6, %cst_27 {dimension_numbers = #tpu.dot_dimension_numbers<[1], [0], [0], [1], [0, 0, 1, 1], [], []>} : vector<8x32xf32>, vector<32x128xf32>, vector<8x128xf32> -> vector<8x128xf32>
    %95 = arith.addf %93, %94 : vector<8x128xf32>
    %96 = arith.negf %95 : vector<8x128xf32>
    %97 = math.exp %96 : vector<8x128xf32>
    %cst_28 = arith.constant 1.000000e+00 : f32
    %98 = vector.broadcast %cst_28 : f32 to vector<8x128xf32>
    %99 = arith.addf %98, %97 : vector<8x128xf32>
    %100 = arith.divf %98, %99 : vector<8x128xf32>
    %101 = vector.extract_strided_slice %100 {offsets = [0, 0], sizes = [8, 32], strides = [1, 1]} : vector<8x128xf32> to vector<8x32xf32>
    %102 = vector.extract_strided_slice %100 {offsets = [0, 32], sizes = [8, 32], strides = [1, 1]} : vector<8x128xf32> to vector<8x32xf32>
    %103 = vector.extract_strided_slice %100 {offsets = [0, 64], sizes = [8, 32], strides = [1, 1]} : vector<8x128xf32> to vector<8x32xf32>
    %cst_29 = arith.constant 2.000000e+00 : f32
    %104 = vector.broadcast %cst_29 : f32 to vector<8x32xf32>
    %105 = arith.mulf %104, %103 : vector<8x32xf32>
    %cst_30 = arith.constant 1.000000e+00 : f32
    %106 = vector.broadcast %cst_30 : f32 to vector<8x32xf32>
    %107 = arith.subf %105, %106 : vector<8x32xf32>
    %108 = vector.extract_strided_slice %100 {offsets = [0, 96], sizes = [8, 32], strides = [1, 1]} : vector<8x128xf32> to vector<8x32xf32>
    %109 = arith.mulf %102, %90 : vector<8x32xf32>
    %110 = arith.mulf %101, %107 : vector<8x32xf32>
    %111 = arith.addf %109, %110 : vector<8x32xf32>
    %112 = math.tanh %111 : vector<8x32xf32>
    %113 = arith.mulf %108, %112 : vector<8x32xf32>
    %114 = vector.extract_strided_slice %5 {offsets = [40, 0], sizes = [8, 128], strides = [1, 1]} : vector<64x128xf32> to vector<8x128xf32>
    %cst_31 = arith.constant dense<0.000000e+00> : vector<8x128xf32>
    %115 = tpu.matmul %113, %6, %cst_31 {dimension_numbers = #tpu.dot_dimension_numbers<[1], [0], [0], [1], [0, 0, 1, 1], [], []>} : vector<8x32xf32>, vector<32x128xf32>, vector<8x128xf32> -> vector<8x128xf32>
    %116 = arith.addf %114, %115 : vector<8x128xf32>
    %117 = arith.negf %116 : vector<8x128xf32>
    %118 = math.exp %117 : vector<8x128xf32>
    %cst_32 = arith.constant 1.000000e+00 : f32
    %119 = vector.broadcast %cst_32 : f32 to vector<8x128xf32>
    %120 = arith.addf %119, %118 : vector<8x128xf32>
    %121 = arith.divf %119, %120 : vector<8x128xf32>
    %122 = vector.extract_strided_slice %121 {offsets = [0, 0], sizes = [8, 32], strides = [1, 1]} : vector<8x128xf32> to vector<8x32xf32>
    %123 = vector.extract_strided_slice %121 {offsets = [0, 32], sizes = [8, 32], strides = [1, 1]} : vector<8x128xf32> to vector<8x32xf32>
    %124 = vector.extract_strided_slice %121 {offsets = [0, 64], sizes = [8, 32], strides = [1, 1]} : vector<8x128xf32> to vector<8x32xf32>
    %cst_33 = arith.constant 2.000000e+00 : f32
    %125 = vector.broadcast %cst_33 : f32 to vector<8x32xf32>
    %126 = arith.mulf %125, %124 : vector<8x32xf32>
    %cst_34 = arith.constant 1.000000e+00 : f32
    %127 = vector.broadcast %cst_34 : f32 to vector<8x32xf32>
    %128 = arith.subf %126, %127 : vector<8x32xf32>
    %129 = vector.extract_strided_slice %121 {offsets = [0, 96], sizes = [8, 32], strides = [1, 1]} : vector<8x128xf32> to vector<8x32xf32>
    %130 = arith.mulf %123, %111 : vector<8x32xf32>
    %131 = arith.mulf %122, %128 : vector<8x32xf32>
    %132 = arith.addf %130, %131 : vector<8x32xf32>
    %133 = math.tanh %132 : vector<8x32xf32>
    %134 = arith.mulf %129, %133 : vector<8x32xf32>
    %135 = vector.extract_strided_slice %5 {offsets = [48, 0], sizes = [8, 128], strides = [1, 1]} : vector<64x128xf32> to vector<8x128xf32>
    %cst_35 = arith.constant dense<0.000000e+00> : vector<8x128xf32>
    %136 = tpu.matmul %134, %6, %cst_35 {dimension_numbers = #tpu.dot_dimension_numbers<[1], [0], [0], [1], [0, 0, 1, 1], [], []>} : vector<8x32xf32>, vector<32x128xf32>, vector<8x128xf32> -> vector<8x128xf32>
    %137 = arith.addf %135, %136 : vector<8x128xf32>
    %138 = arith.negf %137 : vector<8x128xf32>
    %139 = math.exp %138 : vector<8x128xf32>
    %cst_36 = arith.constant 1.000000e+00 : f32
    %140 = vector.broadcast %cst_36 : f32 to vector<8x128xf32>
    %141 = arith.addf %140, %139 : vector<8x128xf32>
    %142 = arith.divf %140, %141 : vector<8x128xf32>
    %143 = vector.extract_strided_slice %142 {offsets = [0, 0], sizes = [8, 32], strides = [1, 1]} : vector<8x128xf32> to vector<8x32xf32>
    %144 = vector.extract_strided_slice %142 {offsets = [0, 32], sizes = [8, 32], strides = [1, 1]} : vector<8x128xf32> to vector<8x32xf32>
    %145 = vector.extract_strided_slice %142 {offsets = [0, 64], sizes = [8, 32], strides = [1, 1]} : vector<8x128xf32> to vector<8x32xf32>
    %cst_37 = arith.constant 2.000000e+00 : f32
    %146 = vector.broadcast %cst_37 : f32 to vector<8x32xf32>
    %147 = arith.mulf %146, %145 : vector<8x32xf32>
    %cst_38 = arith.constant 1.000000e+00 : f32
    %148 = vector.broadcast %cst_38 : f32 to vector<8x32xf32>
    %149 = arith.subf %147, %148 : vector<8x32xf32>
    %150 = vector.extract_strided_slice %142 {offsets = [0, 96], sizes = [8, 32], strides = [1, 1]} : vector<8x128xf32> to vector<8x32xf32>
    %151 = arith.mulf %144, %132 : vector<8x32xf32>
    %152 = arith.mulf %143, %149 : vector<8x32xf32>
    %153 = arith.addf %151, %152 : vector<8x32xf32>
    %154 = math.tanh %153 : vector<8x32xf32>
    %155 = arith.mulf %150, %154 : vector<8x32xf32>
    %156 = vector.extract_strided_slice %5 {offsets = [56, 0], sizes = [8, 128], strides = [1, 1]} : vector<64x128xf32> to vector<8x128xf32>
    %cst_39 = arith.constant dense<0.000000e+00> : vector<8x128xf32>
    %157 = tpu.matmul %155, %6, %cst_39 {dimension_numbers = #tpu.dot_dimension_numbers<[1], [0], [0], [1], [0, 0, 1, 1], [], []>} : vector<8x32xf32>, vector<32x128xf32>, vector<8x128xf32> -> vector<8x128xf32>
    %158 = arith.addf %156, %157 : vector<8x128xf32>
    %159 = arith.negf %158 : vector<8x128xf32>
    %160 = math.exp %159 : vector<8x128xf32>
    %cst_40 = arith.constant 1.000000e+00 : f32
    %161 = vector.broadcast %cst_40 : f32 to vector<8x128xf32>
    %162 = arith.addf %161, %160 : vector<8x128xf32>
    %163 = arith.divf %161, %162 : vector<8x128xf32>
    %164 = vector.extract_strided_slice %163 {offsets = [0, 0], sizes = [8, 32], strides = [1, 1]} : vector<8x128xf32> to vector<8x32xf32>
    %165 = vector.extract_strided_slice %163 {offsets = [0, 32], sizes = [8, 32], strides = [1, 1]} : vector<8x128xf32> to vector<8x32xf32>
    %166 = vector.extract_strided_slice %163 {offsets = [0, 64], sizes = [8, 32], strides = [1, 1]} : vector<8x128xf32> to vector<8x32xf32>
    %cst_41 = arith.constant 2.000000e+00 : f32
    %167 = vector.broadcast %cst_41 : f32 to vector<8x32xf32>
    %168 = arith.mulf %167, %166 : vector<8x32xf32>
    %cst_42 = arith.constant 1.000000e+00 : f32
    %169 = vector.broadcast %cst_42 : f32 to vector<8x32xf32>
    %170 = arith.subf %168, %169 : vector<8x32xf32>
    %171 = vector.extract_strided_slice %163 {offsets = [0, 96], sizes = [8, 32], strides = [1, 1]} : vector<8x128xf32> to vector<8x32xf32>
    %172 = arith.mulf %165, %153 : vector<8x32xf32>
    %173 = arith.mulf %164, %170 : vector<8x32xf32>
    %174 = arith.addf %172, %173 : vector<8x32xf32>
    %175 = math.tanh %174 : vector<8x32xf32>
    %176 = arith.mulf %171, %175 : vector<8x32xf32>
    %c0_43 = arith.constant 0 : index
    %c0_44 = arith.constant 0 : index
    %177 = vector.load %arg9[%c0_43, %c0_44] : memref<8x32xf32, #tpu.memory_space<vmem>>, vector<8x32xf32>
    tpu.vector_store %arg9[%c0_43, %c0_44], %176 {strides = array<i32>} : memref<8x32xf32, #tpu.memory_space<vmem>>, vector<8x32xf32>,
    %c0_45 = arith.constant 0 : index
    %c0_46 = arith.constant 0 : index
    %178 = vector.load %arg10[%c0_45, %c0_46] : memref<8x32xf32, #tpu.memory_space<vmem>>, vector<8x32xf32>
    tpu.vector_store %arg10[%c0_45, %c0_46], %174 {strides = array<i32>} : memref<8x32xf32, #tpu.memory_space<vmem>>, vector<8x32xf32>,
    %179 = tpu.concatenate %29, %50, %71, %92, %113, %134, %155, %176 in 0 : vector<8x32xf32>, vector<8x32xf32>, vector<8x32xf32>, vector<8x32xf32>, vector<8x32xf32>, vector<8x32xf32>, vector<8x32xf32>, vector<8x32xf32> -> vector<64x32xf32>
    %c0_47 = arith.constant 0 : index
    %c0_48 = arith.constant 0 : index
    %180 = vector.load %arg6[%c0_47, %c0_48] : memref<1x32xf32, #tpu.memory_space<vmem>>, vector<1x32xf32>
    %cst_49 = arith.constant dense<0.000000e+00> : vector<1x64xf32>
    %181 = tpu.matmul %180, %179, %cst_49 {dimension_numbers = #tpu.dot_dimension_numbers<[1], [1], [0], [0], [0, 0, 1, 0], [], []>} : vector<1x32xf32>, vector<64x32xf32>, vector<1x64xf32> -> vector<1x64xf32>
    %c0_50 = arith.constant 0 : index
    %c0_51 = arith.constant 0 : index
    %182 = vector.load %arg7[%c0_50, %c0_51] : memref<1x1xf32, #tpu.memory_space<vmem>>, vector<1x1xf32>
    %183 = vector.broadcast %182 : vector<1x1xf32> to vector<1x64xf32>
    %184 = arith.addf %181, %183 : vector<1x64xf32>
    %c0_52 = arith.constant 0 : index
    %c0_53 = arith.constant 0 : index
    %185 = vector.load %arg8[%c0_52, %c0_53] : memref<1x64xf32, #tpu.memory_space<vmem>>, vector<1x64xf32>
    tpu.vector_store %arg8[%c0_52, %c0_53], %184 {strides = array<i32>} : memref<1x64xf32, #tpu.memory_space<vmem>>, vector<1x64xf32>,
    return
  }
}

</mosaic_0001>

<llo_original>
// kernel: rnn_forward.1
$region0: #{rnn_forward.1}
  #allocation0 [shape = 'u32[]', space=smem, size = 0x4, offset = 0x4, fixed_abs, tag = 'smem constant byte address 0x4 - core index']
  #allocation1 [shape = 'u32[144,128]{1,0:T(1,128)}', space=vmem, size = 0x12000, scoped, tag = 'internal scratch']
  #allocation2 [shape = 'f32[1,1]{1,0:T(1,128)S(1)}', space=vmem, size = 0x200, scoped, tag = 'scoped memory for rnn_forward.1']
  %s0 = inlined_call_operand.vmem [shape: f32[64,64], index: 0, kind: input, shape index: {}]
  %s1 = inlined_call_operand.vmem [shape: f32[8,32], index: 1, kind: input, shape index: {}]
  %s2 = inlined_call_operand.vmem [shape: f32[8,32], index: 2, kind: input, shape index: {}]
  %s3 = inlined_call_operand.vmem [shape: f32[64,128], index: 3, kind: input, shape index: {}]
  %s4 = inlined_call_operand.vmem [shape: f32[32,128], index: 4, kind: input, shape index: {}]
  %s5 = inlined_call_operand.vmem [shape: f32[1,128], index: 5, kind: input, shape index: {}]
  %s6 = inlined_call_operand.vmem [shape: f32[1,32], index: 6, kind: input, shape index: {}]
  %s7 = inlined_call_operand.<no memory space> [shape: f32[1,1], index: 7, kind: input, shape index: {}]
  %s8 = inlined_call_operand.vmem [shape: f32[1,64], index: 8, kind: output, shape index: {0}]
  %s9 = inlined_call_operand.vmem [shape: f32[8,32], index: 9, kind: output, shape index: {1}]
  %s10 = inlined_call_operand.vmem [shape: f32[8,32], index: 10, kind: output, shape index: {2}]
  %11 = xla_tuple %s8, %s9, %s10
  %s12 = sld [smem:[#allocation0]]
  $region58: #{rnn_forward.1} parent=0
    _
  %s14 = ssub.s32 1, %s12
  %s15 = scalar_select 0, %s14, %s12
  %v16 = vstv %s7
  %17 = vst [vmem:[#allocation2] sm:$0x1] %v16
  // Predicated region
  $region2: #{rnn_forward.1} parent=0 // pred_check
    _
  $region3: #{rnn_forward.1} parent=0 // pred_check_branch
    %19 = sbr.rel (0) target = $region5
  $region4: #{rnn_forward.1} parent=0 // pred_region
    _
  $region5: #{rnn_forward.1} parent=0 // pred_fallthru
    _
  // Predicated region
  $region6: #{rnn_forward.1} parent=0 // pred_check
    _
  $region7: #{rnn_forward.1} parent=0 // pred_check_branch
    %21 = sbr.rel (0) target = $region9
  $region8: #{rnn_forward.1} parent=0 // pred_region
    _
  $region9: #{rnn_forward.1} parent=0 // pred_fallthru
    _
  // Predicated region
  $region10: #{rnn_forward.1} parent=0 // pred_check
    _
  $region11: #{rnn_forward.1} parent=0 // pred_check_branch
    %23 = sbr.rel (0) target = $region13
  $region12: #{rnn_forward.1} parent=0 // pred_region
    _
  $region13: #{rnn_forward.1} parent=0 // pred_fallthru
    _
  // Predicated region
  $region14: #{rnn_forward.1} parent=0 // pred_check
    _
  $region15: #{rnn_forward.1} parent=0 // pred_check_branch
    %25 = sbr.rel (0) target = $region17
  $region16: #{rnn_forward.1} parent=0 // pred_region
    _
  $region17: #{rnn_forward.1} parent=0 // pred_fallthru
    _
  // Predicated region
  $region18: #{rnn_forward.1} parent=0 // pred_check
    _
  $region19: #{rnn_forward.1} parent=0 // pred_check_branch
    %27 = sbr.rel (0) target = $region21
  $region20: #{rnn_forward.1} parent=0 // pred_region
    _
  $region21: #{rnn_forward.1} parent=0 // pred_fallthru
    _
  // Predicated region
  $region22: #{rnn_forward.1} parent=0 // pred_check
    _
  $region23: #{rnn_forward.1} parent=0 // pred_check_branch
    %29 = sbr.rel (0) target = $region25
  $region24: #{rnn_forward.1} parent=0 // pred_region
    _
  $region25: #{rnn_forward.1} parent=0 // pred_fallthru
    _
  // Predicated region
  $region26: #{rnn_forward.1} parent=0 // pred_check
    _
  $region27: #{rnn_forward.1} parent=0 // pred_check_branch
    %31 = sbr.rel (0) target = $region29
  $region28: #{rnn_forward.1} parent=0 // pred_region
    _
  $region29: #{rnn_forward.1} parent=0 // pred_fallthru
    _
  // Predicated region
  $region30: #{rnn_forward.1} parent=0 // pred_check
    _
  $region31: #{rnn_forward.1} parent=0 // pred_check_branch
    %33 = sbr.rel (0) target = $region33
  $region32: #{rnn_forward.1} parent=0 // pred_region
    _
  $region33: #{rnn_forward.1} parent=0 // pred_fallthru
    _
  %v34 = vld [vmem:[%s0] sm:$0xff]
  %v35 = vld [vmem:[%s0 + $0x8] sm:$0xff]
  %v36 = vld [vmem:[%s0 + $0x10] sm:$0xff]
  %v37 = vld [vmem:[%s0 + $0x18] sm:$0xff]
  %v38 = vld [vmem:[%s0 + $0x20] sm:$0xff]
  %v39 = vld [vmem:[%s0 + $0x28] sm:$0xff]
  %v40 = vld [vmem:[%s0 + $0x30] sm:$0xff]
  %v41 = vld [vmem:[%s0 + $0x38] sm:$0xff]
  %v42 = vld [vmem:[%s3] sm:$0xff]
  %v43 = vld [vmem:[%s3 + $0x8] sm:$0xff]
  %v44 = vld [vmem:[%s3 + $0x10] sm:$0xff]
  %v45 = vld [vmem:[%s3 + $0x18] sm:$0xff]
  %v46 = vld [vmem:[%s3 + $0x20] sm:$0xff]
  %v47 = vld [vmem:[%s3 + $0x28] sm:$0xff]
  %v48 = vld [vmem:[%s3 + $0x30] sm:$0xff]
  %v49 = vld [vmem:[%s3 + $0x38] sm:$0xff]
  %v50 = vld [vmem:[%s5] sm:$0x1]
  %v52 = vlaneseq
  %v53 = vshrl.u32 %v52, 7
  %v54 = vsub.s32 0, %v53
  %v55 = vrot.slane %v50, %v54
  %vm57 = vcmask 523264
  %v59 = vsel %vm57, %v34, 0
  %v62 = vsel %vm57, %v35, 0
  %v65 = vsel %vm57, %v36, 0
  %v68 = vsel %vm57, %v37, 0
  %v71 = vsel %vm57, %v38, 0
  %v74 = vsel %vm57, %v39, 0
  %v77 = vsel %vm57, %v40, 0
  %v80 = vsel %vm57, %v41, 0
  %82 = vmatprep.subr.mxu0 0.0
  %83 = vmatpush1.msra.mxu0 %v42
  %84 = vmatprep.subr.mxu0 0.0
  %85 = vmatpush1.msra.mxu0 %v43
  %86 = vmatprep.subr.mxu0 0.0
  %87 = vmatpush1.msra.mxu0 %v44
  %88 = vmatprep.subr.mxu0 0.0
  %89 = vmatpush1.msra.mxu0 %v45
  %90 = vmatprep.subr.mxu0 0.0
  %91 = vmatpush1.msra.mxu0 %v46
  %92 = vmatprep.subr.mxu0 0.0
  %93 = vmatpush1.msra.mxu0 %v47
  %94 = vmatprep.subr.mxu0 0.0
  %95 = vmatpush1.msra.mxu0 %v48
  %96 = vmatprep.subr.mxu0 0.0
  %97 = vmatpush1.msra.mxu0 %v49
  %98 = vmatprep.subr.mxu0 0.0
  %99 = vmatpush1.msra.mxu0 0.0
  %100 = vmatprep.subr.mxu0 0.0
  %101 = vmatpush1.msra.mxu0 0.0
  %102 = vmatprep.subr.mxu0 0.0
  %103 = vmatpush1.msra.mxu0 0.0
  %104 = vmatprep.subr.mxu0 0.0
  %105 = vmatpush1.msra.mxu0 0.0
  %106 = vmatprep.subr.mxu0 0.0
  %107 = vmatpush1.msra.mxu0 0.0
  %108 = vmatprep.subr.mxu0 0.0
  %109 = vmatpush1.msra.mxu0 0.0
  %110 = vmatprep.subr.mxu0 0.0
  %111 = vmatpush1.msra.mxu0 0.0
  %112 = vmatprep.subr.mxu0 0.0
  %113 = vmatpush1.msra.mxu0 0.0
  %114 = vmatprep.subr.mxu0 0.0
  %115 = vmatpush1.msra.mxu0 0.0
  %116 = vmatprep.subr.mxu0 0.0
  %117 = vmatpush1.msra.mxu0 0.0
  %118 = vmatprep.subr.mxu0 0.0
  %119 = vmatpush1.msra.mxu0 0.0
  %120 = vmatprep.subr.mxu0 0.0
  %121 = vmatpush1.msra.mxu0 0.0
  %122 = vmatprep.subr.mxu0 0.0
  %123 = vmatpush1.msra.mxu0 0.0
  %124 = vmatprep.subr.mxu0 0.0
  %125 = vmatpush1.msra.mxu0 0.0
  %126 = vmatprep.subr.mxu0 0.0
  %127 = vmatpush1.msra.mxu0 0.0
  %128 = vmatprep.subr.mxu0 0.0
  %129 = vmatpush1.msra.mxu0 0.0
  %130 = vmatprep.subr.mxu0 0.0
  %131 = vmatpush1.msra.mxu0 0.0
  %132 = vmatprep.subr.mxu0 0.0
  %133 = vmatpush1.msra.mxu0 0.0
  %134 = vmatprep.subr.mxu0 0.0
  %135 = vmatpush1.msra.mxu0 0.0
  %136 = vmatprep.subr.mxu0 0.0
  %137 = vmatpush1.msra.mxu0 0.0
  %138 = vmatprep.subr.mxu0 0.0
  %139 = vmatpush1.msra.mxu0 0.0
  %140 = vmatprep.subr.mxu0 0.0
  %141 = vmatpush1.msra.mxu0 0.0
  %142 = vmatprep.subr.mxu0 0.0
  %143 = vmatpush1.msra.mxu0 0.0
  %144 = vmatprep.subr.mxu0 0.0
  %145 = vmatpush1.msra.mxu0 0.0
  %146 = vmatprep.mubr.f32.mxu0 0.0
  %147 = vmatmul.mubr.f32.gmra.mrb[0].mxu0 %v59
  %v148 = vpop.f32.mrb[0].mxu0
  %v149 = vadd.f32 %v55, %v148
  %v150 = vpop.f32.mrb[0].mxu0
  %151 = vmatprep.mubr.f32.mxu0 0.0
  %152 = vmatmul.mubr.f32.gmra.mrb[0].mxu0 %v62
  %v153 = vpop.f32.mrb[0].mxu0
  %v154 = vadd.f32 %v55, %v153
  %v155 = vpop.f32.mrb[0].mxu0
  %156 = vmatprep.mubr.f32.mxu0 0.0
  %157 = vmatmul.mubr.f32.gmra.mrb[0].mxu0 %v65
  %v158 = vpop.f32.mrb[0].mxu0
  %v159 = vadd.f32 %v55, %v158
  %v160 = vpop.f32.mrb[0].mxu0
  %161 = vmatprep.mubr.f32.mxu0 0.0
  %162 = vmatmul.mubr.f32.gmra.mrb[0].mxu0 %v68
  %v163 = vpop.f32.mrb[0].mxu0
  %v164 = vadd.f32 %v55, %v163
  %v165 = vpop.f32.mrb[0].mxu0
  %166 = vmatprep.mubr.f32.mxu0 0.0
  %167 = vmatmul.mubr.f32.gmra.mrb[0].mxu0 %v71
  %v168 = vpop.f32.mrb[0].mxu0
  %v169 = vadd.f32 %v55, %v168
  %v170 = vpop.f32.mrb[0].mxu0
  %171 = vmatprep.mubr.f32.mxu0 0.0
  %172 = vmatmul.mubr.f32.gmra.mrb[0].mxu0 %v74
  %v173 = vpop.f32.mrb[0].mxu0
  %v174 = vadd.f32 %v55, %v173
  %v175 = vpop.f32.mrb[0].mxu0
  %176 = vmatprep.mubr.f32.mxu0 0.0
  %177 = vmatmul.mubr.f32.gmra.mrb[0].mxu0 %v77
  %v178 = vpop.f32.mrb[0].mxu0
  %v179 = vadd.f32 %v55, %v178
  %v180 = vpop.f32.mrb[0].mxu0
  %181 = vmatprep.mubr.f32.mxu0 0.0
  %182 = vmatmul.mubr.f32.gmra.mrb[0].mxu0 %v80
  %v183 = vpop.f32.mrb[0].mxu0
  %v184 = vadd.f32 %v55, %v183
  %v185 = vpop.f32.mrb[0].mxu0
  %186 = vdwg.mxu0
  %v187 = vld [vmem:[%s4] sm:$0xff]
  %v188 = vld [vmem:[%s4 + $0x8] sm:$0xff]
  %v189 = vld [vmem:[%s4 + $0x10] sm:$0xff]
  %v190 = vld [vmem:[%s4 + $0x18] sm:$0xff]
  %v191 = vld [vmem:[%s1] sm:$0xff]
  %v192 = vld [vmem:[%s2] sm:$0xff]
  %vm193 = vcmask 261120
  %v195 = vsel %vm193, %v191, 0
  %197 = vmatprep.subr.mxu0 0.0
  %198 = vmatpush1.msra.mxu0 %v187
  %199 = vmatprep.subr.mxu0 0.0
  %200 = vmatpush1.msra.mxu0 %v188
  %201 = vmatprep.subr.mxu0 0.0
  %202 = vmatpush1.msra.mxu0 %v189
  %203 = vmatprep.subr.mxu0 0.0
  %204 = vmatpush1.msra.mxu0 %v190
  %205 = vmatprep.subr.mxu0 0.0
  %206 = vmatpush1.msra.mxu0 0.0
  %207 = vmatprep.subr.mxu0 0.0
  %208 = vmatpush1.msra.mxu0 0.0
  %209 = vmatprep.subr.mxu0 0.0
  %210 = vmatpush1.msra.mxu0 0.0
  %211 = vmatprep.subr.mxu0 0.0
  %212 = vmatpush1.msra.mxu0 0.0
  %213 = vmatprep.subr.mxu0 0.0
  %214 = vmatpush1.msra.mxu0 0.0
  %215 = vmatprep.subr.mxu0 0.0
  %216 = vmatpush1.msra.mxu0 0.0
  %217 = vmatprep.subr.mxu0 0.0
  %218 = vmatpush1.msra.mxu0 0.0
  %219 = vmatprep.subr.mxu0 0.0
  %220 = vmatpush1.msra.mxu0 0.0
  %221 = vmatprep.subr.mxu0 0.0
  %222 = vmatpush1.msra.mxu0 0.0
  %223 = vmatprep.subr.mxu0 0.0
  %224 = vmatpush1.msra.mxu0 0.0
  %225 = vmatprep.subr.mxu0 0.0
  %226 = vmatpush1.msra.mxu0 0.0
  %227 = vmatprep.subr.mxu0 0.0
  %228 = vmatpush1.msra.mxu0 0.0
  %229 = vmatprep.subr.mxu0 0.0
  %230 = vmatpush1.msra.mxu0 0.0
  %231 = vmatprep.subr.mxu0 0.0
  %232 = vmatpush1.msra.mxu0 0.0
  %233 = vmatprep.subr.mxu0 0.0
  %234 = vmatpush1.msra.mxu0 0.0
  %235 = vmatprep.subr.mxu0 0.0
  %236 = vmatpush1.msra.mxu0 0.0
  %237 = vmatprep.subr.mxu0 0.0
  %238 = vmatpush1.msra.mxu0 0.0
  %239 = vmatprep.subr.mxu0 0.0
  %240 = vmatpush1.msra.mxu0 0.0
  %241 = vmatprep.subr.mxu0 0.0
  %242 = vmatpush1.msra.mxu0 0.0
  %243 = vmatprep.subr.mxu0 0.0
  %244 = vmatpush1.msra.mxu0 0.0
  %245 = vmatprep.subr.mxu0 0.0
  %246 = vmatpush1.msra.mxu0 0.0
  %247 = vmatprep.subr.mxu0 0.0
  %248 = vmatpush1.msra.mxu0 0.0
  %249 = vmatprep.subr.mxu0 0.0
  %250 = vmatpush1.msra.mxu0 0.0
  %251 = vmatprep.subr.mxu0 0.0
  %252 = vmatpush1.msra.mxu0 0.0
  %253 = vmatprep.subr.mxu0 0.0
  %254 = vmatpush1.msra.mxu0 0.0
  %255 = vmatprep.subr.mxu0 0.0
  %256 = vmatpush1.msra.mxu0 0.0
  %257 = vmatprep.subr.mxu0 0.0
  %258 = vmatpush1.msra.mxu0 0.0
  %259 = vmatprep.subr.mxu0 0.0
  %260 = vmatpush1.msra.mxu0 0.0
  %261 = vmatprep.mubr.f32.mxu0 0.0
  %262 = vmatmul.mubr.f32.gmra.mrb[0].mxu0 %v195
  %v263 = vpop.f32.mrb[0].mxu0
  %v264 = vadd.f32 0.0, %v263
  %v265 = vpop.f32.mrb[0].mxu0
  %266 = vdwg.mxu0
  %v267 = vadd.f32 %v149, %v264
  %v268 = vxor.u32 %v267, 2147483648
  %v269 = vmul.f32 %v268, 1.442695
  %v270 = vpow.pop %v269
  %v271 = vadd.f32 %v270, 1.0
  %v272 = vrcp.pop %v271
  %v273 = vmul.f32 1.0, %v272
  %v274 = vmul.f32 %v273, 2.0
  %v275 = vsub.f32 %v274, 1.0
  %277 = vrot.lane.b32.xlu0 %v192, 32
  %v278 = vpop.permute.xlu0 %277
  %v280 = vmul.f32 %v273, %v278
  %282 = vrot.lane.b32.xlu0 %v275, 64
  %v283 = vpop.permute.xlu0 %282
  %v285 = vmul.f32 %v273, %v283
  %287 = vrot.lane.b32.xlu0 %v285, 32
  %v288 = vpop.permute.xlu0 %287
  %v290 = vadd.f32 %v280, %v288
  %v291 = vtanh.pop %v290
  %293 = vrot.lane.b32.xlu0 %v291, 64
  %v294 = vpop.permute.xlu0 %293
  %v296 = vmul.f32 %v273, %v294
  %298 = vrot.lane.b32.xlu0 %v296, 32
  %v299 = vpop.permute.xlu0 %298
  %v300 = vsel %vm193, %v299, 0
  %302 = vmatprep.subr.mxu0 0.0
  %303 = vmatpush1.msra.mxu0 %v187
  %304 = vmatprep.subr.mxu0 0.0
  %305 = vmatpush1.msra.mxu0 %v188
  %306 = vmatprep.subr.mxu0 0.0
  %307 = vmatpush1.msra.mxu0 %v189
  %308 = vmatprep.subr.mxu0 0.0
  %309 = vmatpush1.msra.mxu0 %v190
  %310 = vmatprep.subr.mxu0 0.0
  %311 = vmatpush1.msra.mxu0 0.0
  %312 = vmatprep.subr.mxu0 0.0
  %313 = vmatpush1.msra.mxu0 0.0
  %314 = vmatprep.subr.mxu0 0.0
  %315 = vmatpush1.msra.mxu0 0.0
  %316 = vmatprep.subr.mxu0 0.0
  %317 = vmatpush1.msra.mxu0 0.0
  %318 = vmatprep.subr.mxu0 0.0
  %319 = vmatpush1.msra.mxu0 0.0
  %320 = vmatprep.subr.mxu0 0.0
  %321 = vmatpush1.msra.mxu0 0.0
  %322 = vmatprep.subr.mxu0 0.0
  %323 = vmatpush1.msra.mxu0 0.0
  %324 = vmatprep.subr.mxu0 0.0
  %325 = vmatpush1.msra.mxu0 0.0
  %326 = vmatprep.subr.mxu0 0.0
  %327 = vmatpush1.msra.mxu0 0.0
  %328 = vmatprep.subr.mxu0 0.0
  %329 = vmatpush1.msra.mxu0 0.0
  %330 = vmatprep.subr.mxu0 0.0
  %331 = vmatpush1.msra.mxu0 0.0
  %332 = vmatprep.subr.mxu0 0.0
  %333 = vmatpush1.msra.mxu0 0.0
  %334 = vmatprep.subr.mxu0 0.0
  %335 = vmatpush1.msra.mxu0 0.0
  %336 = vmatprep.subr.mxu0 0.0
  %337 = vmatpush1.msra.mxu0 0.0
  %338 = vmatprep.subr.mxu0 0.0
  %339 = vmatpush1.msra.mxu0 0.0
  %340 = vmatprep.subr.mxu0 0.0
  %341 = vmatpush1.msra.mxu0 0.0
  %342 = vmatprep.subr.mxu0 0.0
  %343 = vmatpush1.msra.mxu0 0.0
  %344 = vmatprep.subr.mxu0 0.0
  %345 = vmatpush1.msra.mxu0 0.0
  %346 = vmatprep.subr.mxu0 0.0
  %347 = vmatpush1.msra.mxu0 0.0
  %348 = vmatprep.subr.mxu0 0.0
  %349 = vmatpush1.msra.mxu0 0.0
  %350 = vmatprep.subr.mxu0 0.0
  %351 = vmatpush1.msra.mxu0 0.0
  %352 = vmatprep.subr.mxu0 0.0
  %353 = vmatpush1.msra.mxu0 0.0
  %354 = vmatprep.subr.mxu0 0.0
  %355 = vmatpush1.msra.mxu0 0.0
  %356 = vmatprep.subr.mxu0 0.0
  %357 = vmatpush1.msra.mxu0 0.0
  %358 = vmatprep.subr.mxu0 0.0
  %359 = vmatpush1.msra.mxu0 0.0
  %360 = vmatprep.subr.mxu0 0.0
  %361 = vmatpush1.msra.mxu0 0.0
  %362 = vmatprep.subr.mxu0 0.0
  %363 = vmatpush1.msra.mxu0 0.0
  %364 = vmatprep.subr.mxu0 0.0
  %365 = vmatpush1.msra.mxu0 0.0
  %366 = vmatprep.mubr.f32.mxu0 0.0
  %367 = vmatmul.mubr.f32.gmra.mrb[0].mxu0 %v300
  %v368 = vpop.f32.mrb[0].mxu0
  %v369 = vadd.f32 0.0, %v368
  %v370 = vpop.f32.mrb[0].mxu0
  %371 = vdwg.mxu0
  %v372 = vadd.f32 %v154, %v369
  %v373 = vxor.u32 %v372, 2147483648
  %v374 = vmul.f32 %v373, 1.442695
  %v375 = vpow.pop %v374
  %v376 = vadd.f32 %v375, 1.0
  %v377 = vrcp.pop %v376
  %v378 = vmul.f32 1.0, %v377
  %v379 = vmul.f32 %v378, 2.0
  %v380 = vsub.f32 %v379, 1.0
  %v381 = vmul.f32 %v378, %v290
  %383 = vrot.lane.b32.xlu0 %v380, 64
  %v384 = vpop.permute.xlu0 %383
  %v386 = vmul.f32 %v378, %v384
  %388 = vrot.lane.b32.xlu0 %v386, 32
  %v389 = vpop.permute.xlu0 %388
  %v391 = vadd.f32 %v381, %v389
  %v392 = vtanh.pop %v391
  %394 = vrot.lane.b32.xlu0 %v392, 64
  %v395 = vpop.permute.xlu0 %394
  %v397 = vmul.f32 %v378, %v395
  %399 = vrot.lane.b32.xlu0 %v397, 32
  %v400 = vpop.permute.xlu0 %399
  %v401 = vsel %vm193, %v400, 0
  %403 = vmatprep.subr.mxu0 0.0
  %404 = vmatpush1.msra.mxu0 %v187
  %405 = vmatprep.subr.mxu0 0.0
  %406 = vmatpush1.msra.mxu0 %v188
  %407 = vmatprep.subr.mxu0 0.0
  %408 = vmatpush1.msra.mxu0 %v189
  %409 = vmatprep.subr.mxu0 0.0
  %410 = vmatpush1.msra.mxu0 %v190
  %411 = vmatprep.subr.mxu0 0.0
  %412 = vmatpush1.msra.mxu0 0.0
  %413 = vmatprep.subr.mxu0 0.0
  %414 = vmatpush1.msra.mxu0 0.0
  %415 = vmatprep.subr.mxu0 0.0
  %416 = vmatpush1.msra.mxu0 0.0
  %417 = vmatprep.subr.mxu0 0.0
  %418 = vmatpush1.msra.mxu0 0.0
  %419 = vmatprep.subr.mxu0 0.0
  %420 = vmatpush1.msra.mxu0 0.0
  %421 = vmatprep.subr.mxu0 0.0
  %422 = vmatpush1.msra.mxu0 0.0
  %423 = vmatprep.subr.mxu0 0.0
  %424 = vmatpush1.msra.mxu0 0.0
  %425 = vmatprep.subr.mxu0 0.0
  %426 = vmatpush1.msra.mxu0 0.0
  %427 = vmatprep.subr.mxu0 0.0
  %428 = vmatpush1.msra.mxu0 0.0
  %429 = vmatprep.subr.mxu0 0.0
  %430 = vmatpush1.msra.mxu0 0.0
  %431 = vmatprep.subr.mxu0 0.0
  %432 = vmatpush1.msra.mxu0 0.0
  %433 = vmatprep.subr.mxu0 0.0
  %434 = vmatpush1.msra.mxu0 0.0
  %435 = vmatprep.subr.mxu0 0.0
  %436 = vmatpush1.msra.mxu0 0.0
  %437 = vmatprep.subr.mxu0 0.0
  %438 = vmatpush1.msra.mxu0 0.0
  %439 = vmatprep.subr.mxu0 0.0
  %440 = vmatpush1.msra.mxu0 0.0
  %441 = vmatprep.subr.mxu0 0.0
  %442 = vmatpush1.msra.mxu0 0.0
  %443 = vmatprep.subr.mxu0 0.0
  %444 = vmatpush1.msra.mxu0 0.0
  %445 = vmatprep.subr.mxu0 0.0
  %446 = vmatpush1.msra.mxu0 0.0
  %447 = vmatprep.subr.mxu0 0.0
  %448 = vmatpush1.msra.mxu0 0.0
  %449 = vmatprep.subr.mxu0 0.0
  %450 = vmatpush1.msra.mxu0 0.0
  %451 = vmatprep.subr.mxu0 0.0
  %452 = vmatpush1.msra.mxu0 0.0
  %453 = vmatprep.subr.mxu0 0.0
  %454 = vmatpush1.msra.mxu0 0.0
  %455 = vmatprep.subr.mxu0 0.0
  %456 = vmatpush1.msra.mxu0 0.0
  %457 = vmatprep.subr.mxu0 0.0
  %458 = vmatpush1.msra.mxu0 0.0
  %459 = vmatprep.subr.mxu0 0.0
  %460 = vmatpush1.msra.mxu0 0.0
  %461 = vmatprep.subr.mxu0 0.0
  %462 = vmatpush1.msra.mxu0 0.0
  %463 = vmatprep.subr.mxu0 0.0
  %464 = vmatpush1.msra.mxu0 0.0
  %465 = vmatprep.subr.mxu0 0.0
  %466 = vmatpush1.msra.mxu0 0.0
  %467 = vmatprep.mubr.f32.mxu0 0.0
  %468 = vmatmul.mubr.f32.gmra.mrb[0].mxu0 %v401
  %v469 = vpop.f32.mrb[0].mxu0
  %v470 = vadd.f32 0.0, %v469
  %v471 = vpop.f32.mrb[0].mxu0
  %472 = vdwg.mxu0
  %v473 = vadd.f32 %v159, %v470
  %v474 = vxor.u32 %v473, 2147483648
  %v475 = vmul.f32 %v474, 1.442695
  %v476 = vpow.pop %v475
  %v477 = vadd.f32 %v476, 1.0
  %v478 = vrcp.pop %v477
  %v479 = vmul.f32 1.0, %v478
  %v480 = vmul.f32 %v479, 2.0
  %v481 = vsub.f32 %v480, 1.0
  %v482 = vmul.f32 %v479, %v391
  %484 = vrot.lane.b32.xlu0 %v481, 64
  %v485 = vpop.permute.xlu0 %484
  %v487 = vmul.f32 %v479, %v485
  %489 = vrot.lane.b32.xlu0 %v487, 32
  %v490 = vpop.permute.xlu0 %489
  %v492 = vadd.f32 %v482, %v490
  %v493 = vtanh.pop %v492
  %495 = vrot.lane.b32.xlu0 %v493, 64
  %v496 = vpop.permute.xlu0 %495
  %v498 = vmul.f32 %v479, %v496
  %500 = vrot.lane.b32.xlu0 %v498, 32
  %v501 = vpop.permute.xlu0 %500
  %v502 = vsel %vm193, %v501, 0
  %504 = vmatprep.subr.mxu0 0.0
  %505 = vmatpush1.msra.mxu0 %v187
  %506 = vmatprep.subr.mxu0 0.0
  %507 = vmatpush1.msra.mxu0 %v188
  %508 = vmatprep.subr.mxu0 0.0
  %509 = vmatpush1.msra.mxu0 %v189
  %510 = vmatprep.subr.mxu0 0.0
  %511 = vmatpush1.msra.mxu0 %v190
  %512 = vmatprep.subr.mxu0 0.0
  %513 = vmatpush1.msra.mxu0 0.0
  %514 = vmatprep.subr.mxu0 0.0
  %515 = vmatpush1.msra.mxu0 0.0
  %516 = vmatprep.subr.mxu0 0.0
  %517 = vmatpush1.msra.mxu0 0.0
  %518 = vmatprep.subr.mxu0 0.0
  %519 = vmatpush1.msra.mxu0 0.0
  %520 = vmatprep.subr.mxu0 0.0
  %521 = vmatpush1.msra.mxu0 0.0
  %522 = vmatprep.subr.mxu0 0.0
  %523 = vmatpush1.msra.mxu0 0.0
  %524 = vmatprep.subr.mxu0 0.0
  %525 = vmatpush1.msra.mxu0 0.0
  %526 = vmatprep.subr.mxu0 0.0
  %527 = vmatpush1.msra.mxu0 0.0
  %528 = vmatprep.subr.mxu0 0.0
  %529 = vmatpush1.msra.mxu0 0.0
  %530 = vmatprep.subr.mxu0 0.0
  %531 = vmatpush1.msra.mxu0 0.0
  %532 = vmatprep.subr.mxu0 0.0
  %533 = vmatpush1.msra.mxu0 0.0
  %534 = vmatprep.subr.mxu0 0.0
  %535 = vmatpush1.msra.mxu0 0.0
  %536 = vmatprep.subr.mxu0 0.0
  %537 = vmatpush1.msra.mxu0 0.0
  %538 = vmatprep.subr.mxu0 0.0
  %539 = vmatpush1.msra.mxu0 0.0
  %540 = vmatprep.subr.mxu0 0.0
  %541 = vmatpush1.msra.mxu0 0.0
  %542 = vmatprep.subr.mxu0 0.0
  %543 = vmatpush1.msra.mxu0 0.0
  %544 = vmatprep.subr.mxu0 0.0
  %545 = vmatpush1.msra.mxu0 0.0
  %546 = vmatprep.subr.mxu0 0.0
  %547 = vmatpush1.msra.mxu0 0.0
  %548 = vmatprep.subr.mxu0 0.0
  %549 = vmatpush1.msra.mxu0 0.0
  %550 = vmatprep.subr.mxu0 0.0
  %551 = vmatpush1.msra.mxu0 0.0
  %552 = vmatprep.subr.mxu0 0.0
  %553 = vmatpush1.msra.mxu0 0.0
  %554 = vmatprep.subr.mxu0 0.0
  %555 = vmatpush1.msra.mxu0 0.0
  %556 = vmatprep.subr.mxu0 0.0
  %557 = vmatpush1.msra.mxu0 0.0
  %558 = vmatprep.subr.mxu0 0.0
  %559 = vmatpush1.msra.mxu0 0.0
  %560 = vmatprep.subr.mxu0 0.0
  %561 = vmatpush1.msra.mxu0 0.0
  %562 = vmatprep.subr.mxu0 0.0
  %563 = vmatpush1.msra.mxu0 0.0
  %564 = vmatprep.subr.mxu0 0.0
  %565 = vmatpush1.msra.mxu0 0.0
  %566 = vmatprep.subr.mxu0 0.0
  %567 = vmatpush1.msra.mxu0 0.0
  %568 = vmatprep.mubr.f32.mxu0 0.0
  %569 = vmatmul.mubr.f32.gmra.mrb[0].mxu0 %v502
  %v570 = vpop.f32.mrb[0].mxu0
  %v571 = vadd.f32 0.0, %v570
  %v572 = vpop.f32.mrb[0].mxu0
  %573 = vdwg.mxu0
  %v574 = vadd.f32 %v164, %v571
  %v575 = vxor.u32 %v574, 2147483648
  %v576 = vmul.f32 %v575, 1.442695
  %v577 = vpow.pop %v576
  %v578 = vadd.f32 %v577, 1.0
  %v579 = vrcp.pop %v578
  %v580 = vmul.f32 1.0, %v579
  %v581 = vmul.f32 %v580, 2.0
  %v582 = vsub.f32 %v581, 1.0
  %v583 = vmul.f32 %v580, %v492
  %585 = vrot.lane.b32.xlu0 %v582, 64
  %v586 = vpop.permute.xlu0 %585
  %v588 = vmul.f32 %v580, %v586
  %590 = vrot.lane.b32.xlu0 %v588, 32
  %v591 = vpop.permute.xlu0 %590
  %v593 = vadd.f32 %v583, %v591
  %v594 = vtanh.pop %v593
  %596 = vrot.lane.b32.xlu0 %v594, 64
  %v597 = vpop.permute.xlu0 %596
  %v599 = vmul.f32 %v580, %v597
  %601 = vrot.lane.b32.xlu0 %v599, 32
  %v602 = vpop.permute.xlu0 %601
  %v603 = vsel %vm193, %v602, 0
  %605 = vmatprep.subr.mxu0 0.0
  %606 = vmatpush1.msra.mxu0 %v187
  %607 = vmatprep.subr.mxu0 0.0
  %608 = vmatpush1.msra.mxu0 %v188
  %609 = vmatprep.subr.mxu0 0.0
  %610 = vmatpush1.msra.mxu0 %v189
  %611 = vmatprep.subr.mxu0 0.0
  %612 = vmatpush1.msra.mxu0 %v190
  %613 = vmatprep.subr.mxu0 0.0
  %614 = vmatpush1.msra.mxu0 0.0
  %615 = vmatprep.subr.mxu0 0.0
  %616 = vmatpush1.msra.mxu0 0.0
  %617 = vmatprep.subr.mxu0 0.0
  %618 = vmatpush1.msra.mxu0 0.0
  %619 = vmatprep.subr.mxu0 0.0
  %620 = vmatpush1.msra.mxu0 0.0
  %621 = vmatprep.subr.mxu0 0.0
  %622 = vmatpush1.msra.mxu0 0.0
  %623 = vmatprep.subr.mxu0 0.0
  %624 = vmatpush1.msra.mxu0 0.0
  %625 = vmatprep.subr.mxu0 0.0
  %626 = vmatpush1.msra.mxu0 0.0
  %627 = vmatprep.subr.mxu0 0.0
  %628 = vmatpush1.msra.mxu0 0.0
  %629 = vmatprep.subr.mxu0 0.0
  %630 = vmatpush1.msra.mxu0 0.0
  %631 = vmatprep.subr.mxu0 0.0
  %632 = vmatpush1.msra.mxu0 0.0
  %633 = vmatprep.subr.mxu0 0.0
  %634 = vmatpush1.msra.mxu0 0.0
  %635 = vmatprep.subr.mxu0 0.0
  %636 = vmatpush1.msra.mxu0 0.0
  %637 = vmatprep.subr.mxu0 0.0
  %638 = vmatpush1.msra.mxu0 0.0
  %639 = vmatprep.subr.mxu0 0.0
  %640 = vmatpush1.msra.mxu0 0.0
  %641 = vmatprep.subr.mxu0 0.0
  %642 = vmatpush1.msra.mxu0 0.0
  %643 = vmatprep.subr.mxu0 0.0
  %644 = vmatpush1.msra.mxu0 0.0
  %645 = vmatprep.subr.mxu0 0.0
  %646 = vmatpush1.msra.mxu0 0.0
  %647 = vmatprep.subr.mxu0 0.0
  %648 = vmatpush1.msra.mxu0 0.0
  %649 = vmatprep.subr.mxu0 0.0
  %650 = vmatpush1.msra.mxu0 0.0
  %651 = vmatprep.subr.mxu0 0.0
  %652 = vmatpush1.msra.mxu0 0.0
  %653 = vmatprep.subr.mxu0 0.0
  %654 = vmatpush1.msra.mxu0 0.0
  %655 = vmatprep.subr.mxu0 0.0
  %656 = vmatpush1.msra.mxu0 0.0
  %657 = vmatprep.subr.mxu0 0.0
  %658 = vmatpush1.msra.mxu0 0.0
  %659 = vmatprep.subr.mxu0 0.0
  %660 = vmatpush1.msra.mxu0 0.0
  %661 = vmatprep.subr.mxu0 0.0
  %662 = vmatpush1.msra.mxu0 0.0
  %663 = vmatprep.subr.mxu0 0.0
  %664 = vmatpush1.msra.mxu0 0.0
  %665 = vmatprep.subr.mxu0 0.0
  %666 = vmatpush1.msra.mxu0 0.0
  %667 = vmatprep.subr.mxu0 0.0
  %668 = vmatpush1.msra.mxu0 0.0
  %669 = vmatprep.mubr.f32.mxu0 0.0
  %670 = vmatmul.mubr.f32.gmra.mrb[0].mxu0 %v603
  %v671 = vpop.f32.mrb[0].mxu0
  %v672 = vadd.f32 0.0, %v671
  %v673 = vpop.f32.mrb[0].mxu0
  %674 = vdwg.mxu0
  %v675 = vadd.f32 %v169, %v672
  %v676 = vxor.u32 %v675, 2147483648
  %v677 = vmul.f32 %v676, 1.442695
  %v678 = vpow.pop %v677
  %v679 = vadd.f32 %v678, 1.0
  %v680 = vrcp.pop %v679
  %v681 = vmul.f32 1.0, %v680
  %v682 = vmul.f32 %v681, 2.0
  %v683 = vsub.f32 %v682, 1.0
  %v684 = vmul.f32 %v681, %v593
  %686 = vrot.lane.b32.xlu0 %v683, 64
  %v687 = vpop.permute.xlu0 %686
  %v689 = vmul.f32 %v681, %v687
  %691 = vrot.lane.b32.xlu0 %v689, 32
  %v692 = vpop.permute.xlu0 %691
  %v694 = vadd.f32 %v684, %v692
  %v695 = vtanh.pop %v694
  %697 = vrot.lane.b32.xlu0 %v695, 64
  %v698 = vpop.permute.xlu0 %697
  %v700 = vmul.f32 %v681, %v698
  %702 = vrot.lane.b32.xlu0 %v700, 32
  %v703 = vpop.permute.xlu0 %702
  %v704 = vsel %vm193, %v703, 0
  %706 = vmatprep.subr.mxu0 0.0
  %707 = vmatpush1.msra.mxu0 %v187
  %708 = vmatprep.subr.mxu0 0.0
  %709 = vmatpush1.msra.mxu0 %v188
  %710 = vmatprep.subr.mxu0 0.0
  %711 = vmatpush1.msra.mxu0 %v189
  %712 = vmatprep.subr.mxu0 0.0
  %713 = vmatpush1.msra.mxu0 %v190
  %714 = vmatprep.subr.mxu0 0.0
  %715 = vmatpush1.msra.mxu0 0.0
  %716 = vmatprep.subr.mxu0 0.0
  %717 = vmatpush1.msra.mxu0 0.0
  %718 = vmatprep.subr.mxu0 0.0
  %719 = vmatpush1.msra.mxu0 0.0
  %720 = vmatprep.subr.mxu0 0.0
  %721 = vmatpush1.msra.mxu0 0.0
  %722 = vmatprep.subr.mxu0 0.0
  %723 = vmatpush1.msra.mxu0 0.0
  %724 = vmatprep.subr.mxu0 0.0
  %725 = vmatpush1.msra.mxu0 0.0
  %726 = vmatprep.subr.mxu0 0.0
  %727 = vmatpush1.msra.mxu0 0.0
  %728 = vmatprep.subr.mxu0 0.0
  %729 = vmatpush1.msra.mxu0 0.0
  %730 = vmatprep.subr.mxu0 0.0
  %731 = vmatpush1.msra.mxu0 0.0
  %732 = vmatprep.subr.mxu0 0.0
  %733 = vmatpush1.msra.mxu0 0.0
  %734 = vmatprep.subr.mxu0 0.0
  %735 = vmatpush1.msra.mxu0 0.0
  %736 = vmatprep.subr.mxu0 0.0
  %737 = vmatpush1.msra.mxu0 0.0
  %738 = vmatprep.subr.mxu0 0.0
  %739 = vmatpush1.msra.mxu0 0.0
  %740 = vmatprep.subr.mxu0 0.0
  %741 = vmatpush1.msra.mxu0 0.0
  %742 = vmatprep.subr.mxu0 0.0
  %743 = vmatpush1.msra.mxu0 0.0
  %744 = vmatprep.subr.mxu0 0.0
  %745 = vmatpush1.msra.mxu0 0.0
  %746 = vmatprep.subr.mxu0 0.0
  %747 = vmatpush1.msra.mxu0 0.0
  %748 = vmatprep.subr.mxu0 0.0
  %749 = vmatpush1.msra.mxu0 0.0
  %750 = vmatprep.subr.mxu0 0.0
  %751 = vmatpush1.msra.mxu0 0.0
  %752 = vmatprep.subr.mxu0 0.0
  %753 = vmatpush1.msra.mxu0 0.0
  %754 = vmatprep.subr.mxu0 0.0
  %755 = vmatpush1.msra.mxu0 0.0
  %756 = vmatprep.subr.mxu0 0.0
  %757 = vmatpush1.msra.mxu0 0.0
  %758 = vmatprep.subr.mxu0 0.0
  %759 = vmatpush1.msra.mxu0 0.0
  %760 = vmatprep.subr.mxu0 0.0
  %761 = vmatpush1.msra.mxu0 0.0
  %762 = vmatprep.subr.mxu0 0.0
  %763 = vmatpush1.msra.mxu0 0.0
  %764 = vmatprep.subr.mxu0 0.0
  %765 = vmatpush1.msra.mxu0 0.0
  %766 = vmatprep.subr.mxu0 0.0
  %767 = vmatpush1.msra.mxu0 0.0
  %768 = vmatprep.subr.mxu0 0.0
  %769 = vmatpush1.msra.mxu0 0.0
  %770 = vmatprep.mubr.f32.mxu0 0.0
  %771 = vmatmul.mubr.f32.gmra.mrb[0].mxu0 %v704
  %v772 = vpop.f32.mrb[0].mxu0
  %v773 = vadd.f32 0.0, %v772
  %v774 = vpop.f32.mrb[0].mxu0
  %775 = vdwg.mxu0
  %v776 = vadd.f32 %v174, %v773
  %v777 = vxor.u32 %v776, 2147483648
  %v778 = vmul.f32 %v777, 1.442695
  %v779 = vpow.pop %v778
  %v780 = vadd.f32 %v779, 1.0
  %v781 = vrcp.pop %v780
  %v782 = vmul.f32 1.0, %v781
  %v783 = vmul.f32 %v782, 2.0
  %v784 = vsub.f32 %v783, 1.0
  %v785 = vmul.f32 %v782, %v694
  %787 = vrot.lane.b32.xlu0 %v784, 64
  %v788 = vpop.permute.xlu0 %787
  %v790 = vmul.f32 %v782, %v788
  %792 = vrot.lane.b32.xlu0 %v790, 32
  %v793 = vpop.permute.xlu0 %792
  %v795 = vadd.f32 %v785, %v793
  %v796 = vtanh.pop %v795
  %798 = vrot.lane.b32.xlu0 %v796, 64
  %v799 = vpop.permute.xlu0 %798
  %v801 = vmul.f32 %v782, %v799
  %803 = vrot.lane.b32.xlu0 %v801, 32
  %v804 = vpop.permute.xlu0 %803
  %v805 = vsel %vm193, %v804, 0
  %807 = vmatprep.subr.mxu0 0.0
  %808 = vmatpush1.msra.mxu0 %v187
  %809 = vmatprep.subr.mxu0 0.0
  %810 = vmatpush1.msra.mxu0 %v188
  %811 = vmatprep.subr.mxu0 0.0
  %812 = vmatpush1.msra.mxu0 %v189
  %813 = vmatprep.subr.mxu0 0.0
  %814 = vmatpush1.msra.mxu0 %v190
  %815 = vmatprep.subr.mxu0 0.0
  %816 = vmatpush1.msra.mxu0 0.0
  %817 = vmatprep.subr.mxu0 0.0
  %818 = vmatpush1.msra.mxu0 0.0
  %819 = vmatprep.subr.mxu0 0.0
  %820 = vmatpush1.msra.mxu0 0.0
  %821 = vmatprep.subr.mxu0 0.0
  %822 = vmatpush1.msra.mxu0 0.0
  %823 = vmatprep.subr.mxu0 0.0
  %824 = vmatpush1.msra.mxu0 0.0
  %825 = vmatprep.subr.mxu0 0.0
  %826 = vmatpush1.msra.mxu0 0.0
  %827 = vmatprep.subr.mxu0 0.0
  %828 = vmatpush1.msra.mxu0 0.0
  %829 = vmatprep.subr.mxu0 0.0
  %830 = vmatpush1.msra.mxu0 0.0
  %831 = vmatprep.subr.mxu0 0.0
  %832 = vmatpush1.msra.mxu0 0.0
  %833 = vmatprep.subr.mxu0 0.0
  %834 = vmatpush1.msra.mxu0 0.0
  %835 = vmatprep.subr.mxu0 0.0
  %836 = vmatpush1.msra.mxu0 0.0
  %837 = vmatprep.subr.mxu0 0.0
  %838 = vmatpush1.msra.mxu0 0.0
  %839 = vmatprep.subr.mxu0 0.0
  %840 = vmatpush1.msra.mxu0 0.0
  %841 = vmatprep.subr.mxu0 0.0
  %842 = vmatpush1.msra.mxu0 0.0
  %843 = vmatprep.subr.mxu0 0.0
  %844 = vmatpush1.msra.mxu0 0.0
  %845 = vmatprep.subr.mxu0 0.0
  %846 = vmatpush1.msra.mxu0 0.0
  %847 = vmatprep.subr.mxu0 0.0
  %848 = vmatpush1.msra.mxu0 0.0
  %849 = vmatprep.subr.mxu0 0.0
  %850 = vmatpush1.msra.mxu0 0.0
  %851 = vmatprep.subr.mxu0 0.0
  %852 = vmatpush1.msra.mxu0 0.0
  %853 = vmatprep.subr.mxu0 0.0
  %854 = vmatpush1.msra.mxu0 0.0
  %855 = vmatprep.subr.mxu0 0.0
  %856 = vmatpush1.msra.mxu0 0.0
  %857 = vmatprep.subr.mxu0 0.0
  %858 = vmatpush1.msra.mxu0 0.0
  %859 = vmatprep.subr.mxu0 0.0
  %860 = vmatpush1.msra.mxu0 0.0
  %861 = vmatprep.subr.mxu0 0.0
  %862 = vmatpush1.msra.mxu0 0.0
  %863 = vmatprep.subr.mxu0 0.0
  %864 = vmatpush1.msra.mxu0 0.0
  %865 = vmatprep.subr.mxu0 0.0
  %866 = vmatpush1.msra.mxu0 0.0
  %867 = vmatprep.subr.mxu0 0.0
  %868 = vmatpush1.msra.mxu0 0.0
  %869 = vmatprep.subr.mxu0 0.0
  %870 = vmatpush1.msra.mxu0 0.0
  %871 = vmatprep.mubr.f32.mxu0 0.0
  %872 = vmatmul.mubr.f32.gmra.mrb[0].mxu0 %v805
  %v873 = vpop.f32.mrb[0].mxu0
  %v874 = vadd.f32 0.0, %v873
  %v875 = vpop.f32.mrb[0].mxu0
  %876 = vdwg.mxu0
  %v877 = vadd.f32 %v179, %v874
  %v878 = vxor.u32 %v877, 2147483648
  %v879 = vmul.f32 %v878, 1.442695
  %v880 = vpow.pop %v879
  %v881 = vadd.f32 %v880, 1.0
  %v882 = vrcp.pop %v881
  %v883 = vmul.f32 1.0, %v882
  %v884 = vmul.f32 %v883, 2.0
  %v885 = vsub.f32 %v884, 1.0
  %v886 = vmul.f32 %v883, %v795
  %888 = vrot.lane.b32.xlu0 %v885, 64
  %v889 = vpop.permute.xlu0 %888
  %v891 = vmul.f32 %v883, %v889
  %893 = vrot.lane.b32.xlu0 %v891, 32
  %v894 = vpop.permute.xlu0 %893
  %v896 = vadd.f32 %v886, %v894
  %v897 = vtanh.pop %v896
  %899 = vrot.lane.b32.xlu0 %v897, 64
  %v900 = vpop.permute.xlu0 %899
  %v902 = vmul.f32 %v883, %v900
  %904 = vrot.lane.b32.xlu0 %v902, 32
  %v905 = vpop.permute.xlu0 %904
  %v906 = vsel %vm193, %v905, 0
  %908 = vmatprep.subr.mxu0 0.0
  %909 = vmatpush1.msra.mxu0 %v187
  %910 = vmatprep.subr.mxu0 0.0
  %911 = vmatpush1.msra.mxu0 %v188
  %912 = vmatprep.subr.mxu0 0.0
  %913 = vmatpush1.msra.mxu0 %v189
  %914 = vmatprep.subr.mxu0 0.0
  %915 = vmatpush1.msra.mxu0 %v190
  %916 = vmatprep.subr.mxu0 0.0
  %917 = vmatpush1.msra.mxu0 0.0
  %918 = vmatprep.subr.mxu0 0.0
  %919 = vmatpush1.msra.mxu0 0.0
  %920 = vmatprep.subr.mxu0 0.0
  %921 = vmatpush1.msra.mxu0 0.0
  %922 = vmatprep.subr.mxu0 0.0
  %923 = vmatpush1.msra.mxu0 0.0
  %924 = vmatprep.subr.mxu0 0.0
  %925 = vmatpush1.msra.mxu0 0.0
  %926 = vmatprep.subr.mxu0 0.0
  %927 = vmatpush1.msra.mxu0 0.0
  %928 = vmatprep.subr.mxu0 0.0
  %929 = vmatpush1.msra.mxu0 0.0
  %930 = vmatprep.subr.mxu0 0.0
  %931 = vmatpush1.msra.mxu0 0.0
  %932 = vmatprep.subr.mxu0 0.0
  %933 = vmatpush1.msra.mxu0 0.0
  %934 = vmatprep.subr.mxu0 0.0
  %935 = vmatpush1.msra.mxu0 0.0
  %936 = vmatprep.subr.mxu0 0.0
  %937 = vmatpush1.msra.mxu0 0.0
  %938 = vmatprep.subr.mxu0 0.0
  %939 = vmatpush1.msra.mxu0 0.0
  %940 = vmatprep.subr.mxu0 0.0
  %941 = vmatpush1.msra.mxu0 0.0
  %942 = vmatprep.subr.mxu0 0.0
  %943 = vmatpush1.msra.mxu0 0.0
  %944 = vmatprep.subr.mxu0 0.0
  %945 = vmatpush1.msra.mxu0 0.0
  %946 = vmatprep.subr.mxu0 0.0
  %947 = vmatpush1.msra.mxu0 0.0
  %948 = vmatprep.subr.mxu0 0.0
  %949 = vmatpush1.msra.mxu0 0.0
  %950 = vmatprep.subr.mxu0 0.0
  %951 = vmatpush1.msra.mxu0 0.0
  %952 = vmatprep.subr.mxu0 0.0
  %953 = vmatpush1.msra.mxu0 0.0
  %954 = vmatprep.subr.mxu0 0.0
  %955 = vmatpush1.msra.mxu0 0.0
  %956 = vmatprep.subr.mxu0 0.0
  %957 = vmatpush1.msra.mxu0 0.0
  %958 = vmatprep.subr.mxu0 0.0
  %959 = vmatpush1.msra.mxu0 0.0
  %960 = vmatprep.subr.mxu0 0.0
  %961 = vmatpush1.msra.mxu0 0.0
  %962 = vmatprep.subr.mxu0 0.0
  %963 = vmatpush1.msra.mxu0 0.0
  %964 = vmatprep.subr.mxu0 0.0
  %965 = vmatpush1.msra.mxu0 0.0
  %966 = vmatprep.subr.mxu0 0.0
  %967 = vmatpush1.msra.mxu0 0.0
  %968 = vmatprep.subr.mxu0 0.0
  %969 = vmatpush1.msra.mxu0 0.0
  %970 = vmatprep.subr.mxu0 0.0
  %971 = vmatpush1.msra.mxu0 0.0
  %972 = vmatprep.mubr.f32.mxu0 0.0
  %973 = vmatmul.mubr.f32.gmra.mrb[0].mxu0 %v906
  %v974 = vpop.f32.mrb[0].mxu0
  %v975 = vadd.f32 0.0, %v974
  %v976 = vpop.f32.mrb[0].mxu0
  %977 = vdwg.mxu0
  %v978 = vadd.f32 %v184, %v975
  %v979 = vxor.u32 %v978, 2147483648
  %v980 = vmul.f32 %v979, 1.442695
  %v981 = vpow.pop %v980
  %v982 = vadd.f32 %v981, 1.0
  %v983 = vrcp.pop %v982
  %v984 = vmul.f32 1.0, %v983
  %v985 = vmul.f32 %v984, 2.0
  %v986 = vsub.f32 %v985, 1.0
  %v987 = vmul.f32 %v984, %v896
  %989 = vrot.lane.b32.xlu0 %v986, 64
  %v990 = vpop.permute.xlu0 %989
  %v992 = vmul.f32 %v984, %v990
  %994 = vrot.lane.b32.xlu0 %v992, 32
  %v995 = vpop.permute.xlu0 %994
  %v997 = vadd.f32 %v987, %v995
  %v998 = vtanh.pop %v997
  %1000 = vrot.lane.b32.xlu0 %v998, 64
  %v1001 = vpop.permute.xlu0 %1000
  %v1003 = vmul.f32 %v984, %v1001
  %1005 = vrot.lane.b32.xlu0 %v1003, 32
  %v1006 = vpop.permute.xlu0 %1005
  %1008 = vst.msk [vmem:[%s9] sm:$0xff] %vm193, %v1006
  %1010 = vrot.lane.b32.xlu0 %v997, 96
  %v1011 = vpop.permute.xlu0 %1010
  %1013 = vst.msk [vmem:[%s10] sm:$0xff] %vm193, %v1011
  %v1014 = vld [vmem:[%s6] sm:$0x1]
  %v1015 = vld [vmem:[#allocation2] sm:$0x1]
  %1017 = vset.pattern.permute.xlu0 0
  %1018 = vperm.xlu0 %1017, %v1015
  %v1019 = vpop.permute.xlu0 %1018
  %v1021 = vlaneseq
  %v1022 = vshrl.u32 %v1021, 7
  %v1023 = vsub.s32 0, %v1022
  %v1024 = vrot.slane %v1019, %v1023
  %v1026 = vsel %vm193, %v1014, 0
  %v1028 = vsel %vm193, %v1006, 0
  %1030 = vmatprep.subr.mxu0 0.0
  %1031 = vmatpush1.xpose.msra.mxu0 %v300
  %1032 = vmatprep.subr.mxu0 0.0
  %1033 = vmatpush1.xpose.msra.mxu0 %v401
  %1034 = vmatprep.subr.mxu0 0.0
  %1035 = vmatpush1.xpose.msra.mxu0 %v502
  %1036 = vmatprep.subr.mxu0 0.0
  %1037 = vmatpush1.xpose.msra.mxu0 %v603
  %1038 = vmatprep.subr.mxu0 0.0
  %1039 = vmatpush1.xpose.msra.mxu0 %v704
  %1040 = vmatprep.subr.mxu0 0.0
  %1041 = vmatpush1.xpose.msra.mxu0 %v805
  %1042 = vmatprep.subr.mxu0 0.0
  %1043 = vmatpush1.xpose.msra.mxu0 %v906
  %1044 = vmatprep.subr.mxu0 0.0
  %1045 = vmatpush1.xpose.msra.mxu0 %v1028
  %1046 = vmatprep.subr.mxu0 0.0
  %1047 = vmatpush1.xpose.msra.mxu0 0.0
  %1048 = vmatprep.subr.mxu0 0.0
  %1049 = vmatpush1.xpose.msra.mxu0 0.0
  %1050 = vmatprep.subr.mxu0 0.0
  %1051 = vmatpush1.xpose.msra.mxu0 0.0
  %1052 = vmatprep.subr.mxu0 0.0
  %1053 = vmatpush1.xpose.msra.mxu0 0.0
  %1054 = vmatprep.subr.mxu0 0.0
  %1055 = vmatpush1.xpose.msra.mxu0 0.0
  %1056 = vmatprep.subr.mxu0 0.0
  %1057 = vmatpush1.xpose.msra.mxu0 0.0
  %1058 = vmatprep.subr.mxu0 0.0
  %1059 = vmatpush1.xpose.msra.mxu0 0.0
  %1060 = vmatprep.subr.mxu0 0.0
  %1061 = vmatpush1.xpose.msra.mxu0 0.0
  %1062 = vmatprep.subr.mxu0 0.0
  %1063 = vmatpush1.xpose.msra.mxu0 0.0
  %1064 = vmatprep.subr.mxu0 0.0
  %1065 = vmatpush1.xpose.msra.mxu0 0.0
  %1066 = vmatprep.subr.mxu0 0.0
  %1067 = vmatpush1.xpose.msra.mxu0 0.0
  %1068 = vmatprep.subr.mxu0 0.0
  %1069 = vmatpush1.xpose.msra.mxu0 0.0
  %1070 = vmatprep.subr.mxu0 0.0
  %1071 = vmatpush1.xpose.msra.mxu0 0.0
  %1072 = vmatprep.subr.mxu0 0.0
  %1073 = vmatpush1.xpose.msra.mxu0 0.0
  %1074 = vmatprep.subr.mxu0 0.0
  %1075 = vmatpush1.xpose.msra.mxu0 0.0
  %1076 = vmatprep.subr.mxu0 0.0
  %1077 = vmatpush1.xpose.msra.mxu0 0.0
  %1078 = vmatprep.subr.mxu0 0.0
  %1079 = vmatpush1.xpose.msra.mxu0 0.0
  %1080 = vmatprep.subr.mxu0 0.0
  %1081 = vmatpush1.xpose.msra.mxu0 0.0
  %1082 = vmatprep.subr.mxu0 0.0
  %1083 = vmatpush1.xpose.msra.mxu0 0.0
  %1084 = vmatprep.subr.mxu0 0.0
  %1085 = vmatpush1.xpose.msra.mxu0 0.0
  %1086 = vmatprep.subr.mxu0 0.0
  %1087 = vmatpush1.xpose.msra.mxu0 0.0
  %1088 = vmatprep.subr.mxu0 0.0
  %1089 = vmatpush1.xpose.msra.mxu0 0.0
  %1090 = vmatprep.subr.mxu0 0.0
  %1091 = vmatpush1.xpose.msra.mxu0 0.0
  %1092 = vmatprep.subr.mxu0 0.0
  %1093 = vmatpush1.xpose.msra.mxu0 0.0
  %1094 = vmatprep.mubr.f32.mxu0 0.0
  %1095 = vmatmul.mubr.f32.gmra.mrb[0].mxu0 %v1026
  %v1096 = vpop.f32.mrb[0].mxu0
  %v1097 = vadd.f32 %v1024, %v1096
  %v1098 = vpop.f32.mrb[0].mxu0
  %1099 = vdwg.mxu0
  %vm1100 = vcmask 516096
  %1101 = vst.msk [vmem:[%s8] sm:$0x1] %vm1100, %v1097
  // Predicated region
  $region34: #{rnn_forward.1} parent=0 // pred_check
    _
  $region35: #{rnn_forward.1} parent=0 // pred_check_branch
    %1103 = sbr.rel (0) target = $region37
  $region36: #{rnn_forward.1} parent=0 // pred_region
    _
  $region37: #{rnn_forward.1} parent=0 // pred_fallthru
    _
  // Predicated region
  $region38: #{rnn_forward.1} parent=0 // pred_check
    _
  $region39: #{rnn_forward.1} parent=0 // pred_check_branch
    %1105 = sbr.rel (0) target = $region41
  $region40: #{rnn_forward.1} parent=0 // pred_region
    _
  $region41: #{rnn_forward.1} parent=0 // pred_fallthru
    _
  // Predicated region
  $region42: #{rnn_forward.1} parent=0 // pred_check
    _
  $region43: #{rnn_forward.1} parent=0 // pred_check_branch
    %1107 = sbr.rel (0) target = $region45
  $region44: #{rnn_forward.1} parent=0 // pred_region
    _
  $region45: #{rnn_forward.1} parent=0 // pred_fallthru
    _
  // Predicated region
  $region46: #{rnn_forward.1} parent=0 // pred_check
    _
  $region47: #{rnn_forward.1} parent=0 // pred_check_branch
    %1109 = sbr.rel (0) target = $region49
  $region48: #{rnn_forward.1} parent=0 // pred_region
    _
  $region49: #{rnn_forward.1} parent=0 // pred_fallthru
    _
  // Predicated region
  $region50: #{rnn_forward.1} parent=0 // pred_check
    _
  $region51: #{rnn_forward.1} parent=0 // pred_check_branch
    %1111 = sbr.rel (0) target = $region53
  $region52: #{rnn_forward.1} parent=0 // pred_region
    _
  $region53: #{rnn_forward.1} parent=0 // pred_fallthru
    _
  // Predicated region
  $region54: #{rnn_forward.1} parent=0 // pred_check
    _
  $region55: #{rnn_forward.1} parent=0 // pred_check_branch
    %1113 = sbr.rel (0) target = $region57
  $region56: #{rnn_forward.1} parent=0 // pred_region
    _
  $region57: #{rnn_forward.1} parent=0 // pred_fallthru
    _

</llo_original>
